<compile_context>
chip_gen: v5e
topology: v5e:2x2
jax: 0.10.0
libtpu: 0.0.40
codegen_flags: <defaults>
</compile_context>

<pallas_src>
import jax
import jax.numpy as jnp
from jax.experimental import pallas as pl
from jax.experimental.pallas import tpu as pltpu


_LANE = 128        # vreg lane width
_SUBLANE_PAD = 16  # safe sublane multiple for bf16-packed tiles
_MAX_TILE_B = 128
_MAX_TILE_K = 2048


def _round_up(x, m):
    return ((x + m - 1) // m) * m


def _padded_dims(d_in, hidden, d_out):
    h_pad = _round_up(hidden, _LANE)
    d_out_pad = _round_up(d_out, _LANE)
    d_in_lane = _round_up(d_in, _LANE)
    tile_k = min(d_in_lane, _MAX_TILE_K)
    d_in_pad = _round_up(d_in_lane, tile_k)
    return d_in_pad, tile_k, h_pad, d_out_pad


def _mlp_kernel(x_ref, w1_ref, b1_ref, w2_ref, b2_ref, o_ref, acc_ref):
    """out = relu(x @ w1 + b1) @ w2 + b2, reduced over the d_in grid axis.

    x:   [TILE_B, TILE_K]   bf16   (tiled over batch & K)
    w1:  [TILE_K, H_PAD]    bf16   (tiled over K, resident across batch)
    b1:  [1, H_PAD]         f32    (resident)
    w2:  [H_PAD, D_PAD]     bf16   (resident)
    b2:  [1, D_PAD]         f32    (resident)
    o:   [TILE_B, D_PAD]    f32
    acc: [TILE_B, H_PAD]    f32    VMEM scratch accumulator
    """
    k = pl.program_id(1)

    @pl.when(k == 0)
    def _():
        acc_ref[...] = jnp.zeros_like(acc_ref)

    # Layer-1 partial matmul on the MXU (bf16 in, f32 accumulate).
    acc_ref[...] += jnp.dot(x_ref[...], w1_ref[...],
                            preferred_element_type=jnp.float32)

    @pl.when(k == pl.num_programs(1) - 1)
    def _():
        # Dropout(p=0.25) in eval mode is identity.
        # TODO(synk): training-mode dropout not implemented (would use pltpu PRNG).
        h = jnp.maximum(acc_ref[...] + b1_ref[...], 0.0)          # f32 epilogue
        out = jnp.dot(h.astype(w2_ref.dtype), w2_ref[...],
                      preferred_element_type=jnp.float32) + b2_ref[...]
        o_ref[...] = out.astype(o_ref.dtype)


def prepare_params(w1, b1, w2, b2, d_in):
    """One-time parameter prep: transpose + zero-pad + bf16 cast.

    w1: [hidden, d_in], b1: [hidden], w2: [d_out, hidden], b2: [d_out]
    (PyTorch nn.Linear layout).
    """
    hidden = w1.shape[0]
    d_out = w2.shape[0]
    d_in_pad, _, h_pad, d_out_pad = _padded_dims(d_in, hidden, d_out)

    w1_p = jnp.zeros((d_in_pad, h_pad), jnp.bfloat16)
    w1_p = w1_p.at[:d_in, :hidden].set(jnp.transpose(w1).astype(jnp.bfloat16))
    b1_p = jnp.zeros((1, h_pad), jnp.float32).at[0, :hidden].set(b1)

    w2_p = jnp.zeros((h_pad, d_out_pad), jnp.bfloat16)
    w2_p = w2_p.at[:hidden, :d_out].set(jnp.transpose(w2).astype(jnp.bfloat16))
    b2_p = jnp.zeros((1, d_out_pad), jnp.float32).at[0, :d_out].set(b2)

    return dict(w1=w1_p, b1=b1_p, w2=w2_p, b2=b2_p,
                d_in=d_in, hidden=hidden, d_out=d_out)


def neural_net_forward(x_nchw, params):
    """Forward pass matching the PyTorch NeuralNet (eval mode).

    Args:
      x_nchw: [B, C, H, W] float32 (any trailing shape; flattened from dim 1).
      params: output of prepare_params().
    Returns:
      [B, d_out] float32
    """
    B = x_nchw.shape[0]
    x = x_nchw.reshape(B, -1)                       # Flatten(start_dim=1)
    d_in, hidden, d_out = params["d_in"], params["hidden"], params["d_out"]
    assert x.shape[1] == d_in

    d_in_pad, tile_k, h_pad, d_out_pad = _padded_dims(d_in, hidden, d_out)

    tile_b = min(_MAX_TILE_B, _round_up(B, _SUBLANE_PAD))
    b_pad = _round_up(B, tile_b)

    # Zero-pad batch / d_in and cast to bf16 for the MXU (padding is exact:
    # padded w1 rows are zero, padded output columns are sliced off below).
    x_p = jnp.zeros((b_pad, d_in_pad), jnp.bfloat16)
    x_p = x_p.at[:B, :d_in].set(x.astype(jnp.bfloat16))

    nb = b_pad // tile_b
    nk = d_in_pad // tile_k

    out = pl.pallas_call(
        _mlp_kernel,
        out_shape=jax.ShapeDtypeStruct((b_pad, d_out_pad), jnp.float32),
        grid_spec=pltpu.PrefetchScalarGridSpec(
            num_scalar_prefetch=0,
            grid=(nb, nk),
            in_specs=[
                pl.BlockSpec((tile_b, tile_k), lambda i, k: (i, k)),   # x
                pl.BlockSpec((tile_k, h_pad), lambda i, k: (k, 0)),    # w1
                pl.BlockSpec((1, h_pad), lambda i, k: (0, 0)),         # b1 (resident)
                pl.BlockSpec((h_pad, d_out_pad), lambda i, k: (0, 0)), # w2 (resident)
                pl.BlockSpec((1, d_out_pad), lambda i, k: (0, 0)),     # b2 (resident)
            ],
            out_specs=pl.BlockSpec((tile_b, d_out_pad), lambda i, k: (i, 0)),
            scratch_shapes=[pltpu.VMEM((tile_b, h_pad), jnp.float32)],
        ),
        compiler_params=pltpu.CompilerParams(
            dimension_semantics=("parallel", "arbitrary")),
    )(x_p, params["w1"], params["b1"], params["w2"], params["b2"])

    return out[:B, :d_out]


def _reference_forward(x_nchw, w1, b1, w2, b2):
    x = x_nchw.reshape(x_nchw.shape[0], -1)
    h = x @ w1.T + b1
    h = jnp.maximum(h, 0.0)
    return h @ w2.T + b2


if __name__ == "__main__":
    # Example sizes: x = [2, 4, 16, 16] -> in_features = 1024, hidden = 32, out = 10
    B, C, H, W = 2, 4, 16, 16
    in_features = C * H * W
    hidden_size = 32
    output_size = 10

    key = jax.random.PRNGKey(0)
    kx, k1, k2, k3, k4 = jax.random.split(key, 5)

    x = jax.random.normal(kx, (B, C, H, W), dtype=jnp.float32)
    # Deterministic parameter init (uniform, like PyTorch's default scale).
    bound1 = 1.0 / jnp.sqrt(in_features)
    bound2 = 1.0 / jnp.sqrt(hidden_size)
    w1 = jax.random.uniform(k1, (hidden_size, in_features), jnp.float32, -bound1, bound1)
    b1 = jax.random.uniform(k2, (hidden_size,), jnp.float32, -bound1, bound1)
    w2 = jax.random.uniform(k3, (output_size, hidden_size), jnp.float32, -bound2, bound2)
    b2 = jax.random.uniform(k4, (output_size,), jnp.float32, -bound2, bound2)

    params = prepare_params(w1, b1, w2, b2, d_in=in_features)   # one-time prep
    out = neural_net_forward(x, params)
    out = jax.block_until_ready(out)

    ref = _reference_forward(x, w1, b1, w2, b2)
    assert out.shape == (B, output_size)
    # bf16 matmul inputs with f32 accumulation -> loose tolerance vs f32 reference.
    assert jnp.allclose(out, ref, atol=3e-2, rtol=3e-2), \
        f"max abs err {jnp.max(jnp.abs(out - ref))}"

    print("KERNEL_OK")
</pallas_src>

<mosaic_0001>
module attributes {stable_mosaic.version = 11 : i64} {
  func.func @_mlp_kernel(%arg0: i32, %arg1: i32, %arg2: memref<16x1024xbf16, #tpu.memory_space<vmem>>, %arg3: memref<1024x128xbf16, #tpu.memory_space<vmem>>, %arg4: memref<1x128xf32, #tpu.memory_space<vmem>>, %arg5: memref<128x128xbf16, #tpu.memory_space<vmem>>, %arg6: memref<1x128xf32, #tpu.memory_space<vmem>>, %arg7: memref<16x128xf32, #tpu.memory_space<vmem>>, %arg8: memref<16x128xf32, #tpu.memory_space<vmem>>) attributes {dimension_semantics = [#tpu.dimension_semantics<parallel>, #tpu.dimension_semantics<arbitrary>], iteration_bounds = array<i64: 1, 1>, scalar_prefetch = 0 : i64, scratch_operands = 1 : i64, tpu.core_type = #tpu.core_type<tc>, window_params = [{transform_indices = @transform_0, window_bounds = array<i64: 16, 1024>}, {transform_indices = @transform_1, window_bounds = array<i64: 1024, 128>}, {pipeline_mode = #tpu.pipeline_mode<synchronous>, transform_indices = @transform_2, window_bounds = array<i64: 1, 128>}, {pipeline_mode = #tpu.pipeline_mode<synchronous>, transform_indices = @transform_3, window_bounds = array<i64: 128, 128>}, {pipeline_mode = #tpu.pipeline_mode<synchronous>, transform_indices = @transform_4, window_bounds = array<i64: 1, 128>}, {transform_indices = @transform_5, window_bounds = array<i64: 16, 128>}]} {
    %c0_i32 = arith.constant 0 : i32
    %0 = arith.cmpi eq, %arg1, %c0_i32 : i32
    %1 = arith.extui %0 : i1 to i32
    %c0_i32_0 = arith.constant 0 : i32
    %2 = arith.cmpi ne, %1, %c0_i32_0 : i32
    scf.if %2 {
      %cst_10 = arith.constant 0.000000e+00 : f32
      %12 = vector.broadcast %cst_10 : f32 to vector<16x128xf32>
      %c0_11 = arith.constant 0 : index
      %c0_12 = arith.constant 0 : index
      %13 = vector.load %arg8[%c0_11, %c0_12] : memref<16x128xf32, #tpu.memory_space<vmem>>, vector<16x128xf32>
      tpu.vector_store %arg8[%c0_11, %c0_12], %12 {strides = array<i32>} : memref<16x128xf32, #tpu.memory_space<vmem>>, vector<16x128xf32>,
    } else {
    }
    %c0 = arith.constant 0 : index
    %c0_1 = arith.constant 0 : index
    %3 = vector.load %arg8[%c0, %c0_1] : memref<16x128xf32, #tpu.memory_space<vmem>>, vector<16x128xf32>
    %c0_2 = arith.constant 0 : index
    %c0_3 = arith.constant 0 : index
    %4 = vector.load %arg2[%c0_2, %c0_3] : memref<16x1024xbf16, #tpu.memory_space<vmem>>, vector<16x1024xbf16>
    %c0_4 = arith.constant 0 : index
    %c0_5 = arith.constant 0 : index
    %5 = vector.load %arg3[%c0_4, %c0_5] : memref<1024x128xbf16, #tpu.memory_space<vmem>>, vector<1024x128xbf16>
    %cst = arith.constant dense<0.000000e+00> : vector<16x128xf32>
    %6 = tpu.matmul %4, %5, %cst {dimension_numbers = #tpu.dot_dimension_numbers<[1], [0], [0], [1], [0, 0, 1, 1], [], []>} : vector<16x1024xbf16>, vector<1024x128xbf16>, vector<16x128xf32> -> vector<16x128xf32>
    %7 = arith.addf %3, %6 : vector<16x128xf32>
    %c0_6 = arith.constant 0 : index
    %c0_7 = arith.constant 0 : index
    %8 = vector.load %arg8[%c0_6, %c0_7] : memref<16x128xf32, #tpu.memory_space<vmem>>, vector<16x128xf32>
    tpu.vector_store %arg8[%c0_6, %c0_7], %7 {strides = array<i32>} : memref<16x128xf32, #tpu.memory_space<vmem>>, vector<16x128xf32>,
    %c0_i32_8 = arith.constant 0 : i32
    %9 = arith.cmpi eq, %arg1, %c0_i32_8 : i32
    %10 = arith.extui %9 : i1 to i32
    %c0_i32_9 = arith.constant 0 : i32
    %11 = arith.cmpi ne, %10, %c0_i32_9 : i32
    scf.if %11 {
      %c0_10 = arith.constant 0 : index
      %c0_11 = arith.constant 0 : index
      %12 = vector.load %arg8[%c0_10, %c0_11] : memref<16x128xf32, #tpu.memory_space<vmem>>, vector<16x128xf32>
      %c0_12 = arith.constant 0 : index
      %c0_13 = arith.constant 0 : index
      %13 = vector.load %arg4[%c0_12, %c0_13] : memref<1x128xf32, #tpu.memory_space<vmem>>, vector<1x128xf32>
      %14 = vector.broadcast %13 : vector<1x128xf32> to vector<16x128xf32>
      %15 = arith.addf %12, %14 : vector<16x128xf32>
      %cst_14 = arith.constant 0.000000e+00 : f32
      %16 = vector.broadcast %cst_14 : f32 to vector<16x128xf32>
      %17 = arith.maximumf %15, %16 : vector<16x128xf32>
      %18 = arith.truncf %17 : vector<16x128xf32> to vector<16x128xbf16>
      %c0_15 = arith.constant 0 : index
      %c0_16 = arith.constant 0 : index
      %19 = vector.load %arg5[%c0_15, %c0_16] : memref<128x128xbf16, #tpu.memory_space<vmem>>, vector<128x128xbf16>
      %cst_17 = arith.constant dense<0.000000e+00> : vector<16x128xf32>
      %20 = tpu.matmul %18, %19, %cst_17 {dimension_numbers = #tpu.dot_dimension_numbers<[1], [0], [0], [1], [0, 0, 1, 1], [], []>} : vector<16x128xbf16>, vector<128x128xbf16>, vector<16x128xf32> -> vector<16x128xf32>
      %c0_18 = arith.constant 0 : index
      %c0_19 = arith.constant 0 : index
      %21 = vector.load %arg6[%c0_18, %c0_19] : memref<1x128xf32, #tpu.memory_space<vmem>>, vector<1x128xf32>
      %22 = vector.broadcast %21 : vector<1x128xf32> to vector<16x128xf32>
      %23 = arith.addf %20, %22 : vector<16x128xf32>
      %c0_20 = arith.constant 0 : index
      %c0_21 = arith.constant 0 : index
      %24 = vector.load %arg7[%c0_20, %c0_21] : memref<16x128xf32, #tpu.memory_space<vmem>>, vector<16x128xf32>
      tpu.vector_store %arg7[%c0_20, %c0_21], %23 {strides = array<i32>} : memref<16x128xf32, #tpu.memory_space<vmem>>, vector<16x128xf32>,
    } else {
    }
    return
  }
  func.func @transform_0(%arg0: i32, %arg1: i32) -> (i32, i32) {
    %c0_i32 = arith.constant 0 : i32
    return %arg0, %arg1 : i32, i32
  }
  func.func @transform_1(%arg0: i32, %arg1: i32) -> (i32, i32) {
    %c0_i32 = arith.constant 0 : i32
    %c0_i32_0 = arith.constant 0 : i32
    return %arg1, %c0_i32 : i32, i32
  }
  func.func @transform_2(%arg0: i32, %arg1: i32) -> (i32, i32) {
    %c0_i32 = arith.constant 0 : i32
    %c0_i32_0 = arith.constant 0 : i32
    %c0_i32_1 = arith.constant 0 : i32
    return %c0_i32, %c0_i32_0 : i32, i32
  }
  func.func @transform_3(%arg0: i32, %arg1: i32) -> (i32, i32) {
    %c0_i32 = arith.constant 0 : i32
    %c0_i32_0 = arith.constant 0 : i32
    %c0_i32_1 = arith.constant 0 : i32
    return %c0_i32, %c0_i32_0 : i32, i32
  }
  func.func @transform_4(%arg0: i32, %arg1: i32) -> (i32, i32) {
    %c0_i32 = arith.constant 0 : i32
    %c0_i32_0 = arith.constant 0 : i32
    %c0_i32_1 = arith.constant 0 : i32
    return %c0_i32, %c0_i32_0 : i32, i32
  }
  func.func @transform_5(%arg0: i32, %arg1: i32) -> (i32, i32) {
    %c0_i32 = arith.constant 0 : i32
    %c0_i32_0 = arith.constant 0 : i32
    return %arg0, %c0_i32 : i32, i32
  }
}

</mosaic_0001>

<llo_original>
// kernel: tpu_custom_call.1
$region0: #{tpu_custom_call.1}
  #allocation0 [shape = 'u32[]', space=smem, size = 0x4, offset = 0x4, fixed_abs, tag = 'smem constant byte address 0x4 - core index']
  #allocation1 [shape = 'u32[72,128]{1,0:T(1,128)}', space=vmem, size = 0x9000, scoped, tag = 'internal scratch']
  #allocation2 [shape = 'f32[16,128]{1,0:T(8,128)}', space=vmem, size = 0x2000, scoped, tag = 'scratch operand']
  %s0 = inlined_call_operand.hbm [shape: bf16[16,1024], index: 0, kind: input, shape index: {}]
  %s1 = inlined_call_operand.hbm [shape: bf16[1024,128], index: 1, kind: input, shape index: {}]
  %s2 = inlined_call_operand.vmem [shape: f32[1,128], index: 2, kind: input, shape index: {}]
  %s3 = inlined_call_operand.hbm [shape: bf16[128,128], index: 3, kind: input, shape index: {}]
  %s4 = inlined_call_operand.vmem [shape: f32[1,128], index: 4, kind: input, shape index: {}]
  %s5 = inlined_call_operand.hbm [shape: f32[16,128], index: 5, kind: output, shape index: {}]
  %s6 = sld [smem:[#allocation0]]
  $region50: #{tpu_custom_call.1} parent=0
    _
  %s8 = ssub.s32 1, %s6
  %s9 = scalar_select 0, %s8, %s6
  $region1: #{tpu_custom_call.1} parent=0
    #allocation3 [shape = 'u8[32768]{0}', space=vmem, size = 0x8000, scoped, tag = 'input window, operand 0, single buffered']
    #allocation4 [shape = 's32[1]{0}', space=sflag, size = 0x4, scoped, tag = 'scoped memory for tpu_custom_call.1']
    #allocation5 [shape = 's32[1]{0}', space=sflag, size = 0x4, scoped, tag = 'scoped memory for tpu_custom_call.1']
    #allocation6 [shape = 'u8[262144]{0}', space=vmem, size = 0x40000, scoped, tag = 'input window, operand 1, single buffered']
    #allocation7 [shape = 's32[1]{0}', space=sflag, size = 0x4, scoped, tag = 'scoped memory for tpu_custom_call.1']
    #allocation8 [shape = 'u8[32768]{0}', space=vmem, size = 0x8000, scoped, tag = 'input window, operand 3, single buffered']
    #allocation9 [shape = 'u8[8192]{0}', space=vmem, size = 0x2000, scoped, tag = 'output window, operand 0, single buffered']
    %10 = vsyncpa [#allocation4], 0
    %11 = vsyncpa [#allocation7], 0
    %12 = vsyncpa [#allocation5], 0
    // Predicated region
    $region2: #{tpu_custom_call.1} parent=1 // pred_check
      _
    $region3: #{tpu_custom_call.1} parent=1 // pred_check_branch
      %14 = sbr.rel (0) target = $region5
    $region4: #{tpu_custom_call.1} parent=1 // pred_region
      %16 = vsyncadd [#allocation4], 0
      %s17 = sshll.u32 %s0, 4
      %s18 = int_to_ptr.hbm [resolvable:$true] %s17
      %s19 = sshll.u32 [#allocation3], 4
      %s20 = int_to_ptr.vmem [resolvable:$true] %s19
      %25 = dma.hbm_to_vmem [thread:$0]  %s18, 1024, %s20, [#allocation4], 512, 512, 32
    $region5: #{tpu_custom_call.1} parent=1 // pred_fallthru
      _
    // Predicated region
    $region6: #{tpu_custom_call.1} parent=1 // pred_check
      _
    $region7: #{tpu_custom_call.1} parent=1 // pred_check_branch
      %27 = sbr.rel (0) target = $region9
    $region8: #{tpu_custom_call.1} parent=1 // pred_region
      %29 = vsyncadd [#allocation7], 0
      %s30 = sshll.u32 %s1, 4
      %s31 = int_to_ptr.hbm [resolvable:$true] %s30
      %s32 = sshll.u32 [#allocation6], 4
      %s33 = int_to_ptr.vmem [resolvable:$true] %s32
      %38 = dma.hbm_to_vmem [thread:$0]  %s31, 8192, %s33, [#allocation7], 64, 64, 4
    $region9: #{tpu_custom_call.1} parent=1 // pred_fallthru
      _
    // Predicated region
    $region10: #{tpu_custom_call.1} parent=1 // pred_check
      _
    $region11: #{tpu_custom_call.1} parent=1 // pred_check_branch
      %40 = sbr.rel (0) target = $region13
    $region12: #{tpu_custom_call.1} parent=1 // pred_region
      _
    $region13: #{tpu_custom_call.1} parent=1 // pred_fallthru
      _
    // Predicated region
    $region14: #{tpu_custom_call.1} parent=1 // pred_check
      _
    $region15: #{tpu_custom_call.1} parent=1 // pred_check_branch
      %42 = sbr.rel (0) target = $region17
    $region16: #{tpu_custom_call.1} parent=1 // pred_region
      %44 = vsyncadd [#allocation7], 0
      %s45 = sshll.u32 %s3, 4
      %s46 = int_to_ptr.hbm [resolvable:$true] %s45
      %s47 = sshll.u32 [#allocation8], 4
      %s48 = int_to_ptr.vmem [resolvable:$true] %s47
      %53 = dma.hbm_to_vmem [thread:$0]  %s46, 1024, %s48, [#allocation7], 64, 64, 4
    $region17: #{tpu_custom_call.1} parent=1 // pred_fallthru
      _
    // Predicated region
    $region18: #{tpu_custom_call.1} parent=1 // pred_check
      _
    $region19: #{tpu_custom_call.1} parent=1 // pred_check_branch
      %55 = sbr.rel (0) target = $region21
    $region20: #{tpu_custom_call.1} parent=1 // pred_region
      _
    $region21: #{tpu_custom_call.1} parent=1 // pred_fallthru
      _
    // Predicated region
    $region22: #{tpu_custom_call.1} parent=1 // pred_check
      _
    $region23: #{tpu_custom_call.1} parent=1 // pred_check_branch
      %57 = sbr.rel (0) target = $region25
    $region24: #{tpu_custom_call.1} parent=1 // pred_region
      %59 = dma.done [#allocation4], 1024
    $region25: #{tpu_custom_call.1} parent=1 // pred_fallthru
      _
    // Predicated region
    $region26: #{tpu_custom_call.1} parent=1 // pred_check
      _
    $region27: #{tpu_custom_call.1} parent=1 // pred_check_branch
      %61 = sbr.rel (0) target = $region29
    $region28: #{tpu_custom_call.1} parent=1 // pred_region
      %63 = dma.done [#allocation7], 8192
    $region29: #{tpu_custom_call.1} parent=1 // pred_fallthru
      _
    // Predicated region
    $region30: #{tpu_custom_call.1} parent=1 // pred_check
      _
    $region31: #{tpu_custom_call.1} parent=1 // pred_check_branch
      %65 = sbr.rel (0) target = $region33
    $region32: #{tpu_custom_call.1} parent=1 // pred_region
      %67 = dma.done [#allocation7], 1024
    $region33: #{tpu_custom_call.1} parent=1 // pred_fallthru
      _
    %p68 = scmp.eq.s32.totalorder 0, 0
    // Predicated region
    $region34: #{tpu_custom_call.1} parent=1 // pred_check
      %p69 = pneg %p68
    $region35: #{tpu_custom_call.1} parent=1 // pred_check_branch
      %71 = sbr.rel (%p69) target = $region37
    $region36: #{tpu_custom_call.1} parent=1 // pred_region
      %72 = vst [vmem:[#allocation2] sm:$0xff] 0.0
      %73 = vst [vmem:[#allocation2 + $0x8] sm:$0xff] 0.0
    $region37: #{tpu_custom_call.1} parent=1 // pred_fallthru
      _
    %v74 = vld [vmem:[#allocation2] sm:$0xff]
    %v75 = vld [vmem:[#allocation2 + $0x8] sm:$0xff]
    %v76 = vld [vmem:[#allocation3] sm:$0xff]
    %v77 = vld [vmem:[#allocation3 + $0x8] sm:$0xff]
    %v78 = vld [vmem:[#allocation3 + $0x10] sm:$0xff]
    %v79 = vld [vmem:[#allocation3 + $0x18] sm:$0xff]
    %v80 = vld [vmem:[#allocation3 + $0x20] sm:$0xff]
    %v81 = vld [vmem:[#allocation3 + $0x28] sm:$0xff]
    %v82 = vld [vmem:[#allocation3 + $0x30] sm:$0xff]
    %v83 = vld [vmem:[#allocation3 + $0x38] sm:$0xff]
    %v84 = vld [vmem:[#allocation6] sm:$0xf]
    %v85 = vld [vmem:[#allocation6 + $0x4] sm:$0xf]
    %v86 = vld [vmem:[#allocation6 + $0x8] sm:$0xf]
    %v87 = vld [vmem:[#allocation6 + $0xc] sm:$0xf]
    %v88 = vld [vmem:[#allocation6 + $0x10] sm:$0xf]
    %v89 = vld [vmem:[#allocation6 + $0x14] sm:$0xf]
    %v90 = vld [vmem:[#allocation6 + $0x18] sm:$0xf]
    %v91 = vld [vmem:[#allocation6 + $0x1c] sm:$0xf]
    %v92 = vld [vmem:[#allocation6 + $0x20] sm:$0xf]
    %v93 = vld [vmem:[#allocation6 + $0x24] sm:$0xf]
    %v94 = vld [vmem:[#allocation6 + $0x28] sm:$0xf]
    %v95 = vld [vmem:[#allocation6 + $0x2c] sm:$0xf]
    %v96 = vld [vmem:[#allocation6 + $0x30] sm:$0xf]
    %v97 = vld [vmem:[#allocation6 + $0x34] sm:$0xf]
    %v98 = vld [vmem:[#allocation6 + $0x38] sm:$0xf]
    %v99 = vld [vmem:[#allocation6 + $0x3c] sm:$0xf]
    %v100 = vld [vmem:[#allocation6 + $0x40] sm:$0xf]
    %v101 = vld [vmem:[#allocation6 + $0x44] sm:$0xf]
    %v102 = vld [vmem:[#allocation6 + $0x48] sm:$0xf]
    %v103 = vld [vmem:[#allocation6 + $0x4c] sm:$0xf]
    %v104 = vld [vmem:[#allocation6 + $0x50] sm:$0xf]
    %v105 = vld [vmem:[#allocation6 + $0x54] sm:$0xf]
    %v106 = vld [vmem:[#allocation6 + $0x58] sm:$0xf]
    %v107 = vld [vmem:[#allocation6 + $0x5c] sm:$0xf]
    %v108 = vld [vmem:[#allocation6 + $0x60] sm:$0xf]
    %v109 = vld [vmem:[#allocation6 + $0x64] sm:$0xf]
    %v110 = vld [vmem:[#allocation6 + $0x68] sm:$0xf]
    %v111 = vld [vmem:[#allocation6 + $0x6c] sm:$0xf]
    %v112 = vld [vmem:[#allocation6 + $0x70] sm:$0xf]
    %v113 = vld [vmem:[#allocation6 + $0x74] sm:$0xf]
    %v114 = vld [vmem:[#allocation6 + $0x78] sm:$0xf]
    %v115 = vld [vmem:[#allocation6 + $0x7c] sm:$0xf]
    %v116 = vld [vmem:[#allocation6 + $0x80] sm:$0xf]
    %v117 = vld [vmem:[#allocation6 + $0x84] sm:$0xf]
    %v118 = vld [vmem:[#allocation6 + $0x88] sm:$0xf]
    %v119 = vld [vmem:[#allocation6 + $0x8c] sm:$0xf]
    %v120 = vld [vmem:[#allocation6 + $0x90] sm:$0xf]
    %v121 = vld [vmem:[#allocation6 + $0x94] sm:$0xf]
    %v122 = vld [vmem:[#allocation6 + $0x98] sm:$0xf]
    %v123 = vld [vmem:[#allocation6 + $0x9c] sm:$0xf]
    %v124 = vld [vmem:[#allocation6 + $0xa0] sm:$0xf]
    %v125 = vld [vmem:[#allocation6 + $0xa4] sm:$0xf]
    %v126 = vld [vmem:[#allocation6 + $0xa8] sm:$0xf]
    %v127 = vld [vmem:[#allocation6 + $0xac] sm:$0xf]
    %v128 = vld [vmem:[#allocation6 + $0xb0] sm:$0xf]
    %v129 = vld [vmem:[#allocation6 + $0xb4] sm:$0xf]
    %v130 = vld [vmem:[#allocation6 + $0xb8] sm:$0xf]
    %v131 = vld [vmem:[#allocation6 + $0xbc] sm:$0xf]
    %v132 = vld [vmem:[#allocation6 + $0xc0] sm:$0xf]
    %v133 = vld [vmem:[#allocation6 + $0xc4] sm:$0xf]
    %v134 = vld [vmem:[#allocation6 + $0xc8] sm:$0xf]
    %v135 = vld [vmem:[#allocation6 + $0xcc] sm:$0xf]
    %v136 = vld [vmem:[#allocation6 + $0xd0] sm:$0xf]
    %v137 = vld [vmem:[#allocation6 + $0xd4] sm:$0xf]
    %v138 = vld [vmem:[#allocation6 + $0xd8] sm:$0xf]
    %v139 = vld [vmem:[#allocation6 + $0xdc] sm:$0xf]
    %v140 = vld [vmem:[#allocation6 + $0xe0] sm:$0xf]
    %v141 = vld [vmem:[#allocation6 + $0xe4] sm:$0xf]
    %v142 = vld [vmem:[#allocation6 + $0xe8] sm:$0xf]
    %v143 = vld [vmem:[#allocation6 + $0xec] sm:$0xf]
    %v144 = vld [vmem:[#allocation6 + $0xf0] sm:$0xf]
    %v145 = vld [vmem:[#allocation6 + $0xf4] sm:$0xf]
    %v146 = vld [vmem:[#allocation6 + $0xf8] sm:$0xf]
    %v147 = vld [vmem:[#allocation6 + $0xfc] sm:$0xf]
    %v148 = vld [vmem:[#allocation6 + $0x100] sm:$0xf]
    %v149 = vld [vmem:[#allocation6 + $0x104] sm:$0xf]
    %v150 = vld [vmem:[#allocation6 + $0x108] sm:$0xf]
    %v151 = vld [vmem:[#allocation6 + $0x10c] sm:$0xf]
    %v152 = vld [vmem:[#allocation6 + $0x110] sm:$0xf]
    %v153 = vld [vmem:[#allocation6 + $0x114] sm:$0xf]
    %v154 = vld [vmem:[#allocation6 + $0x118] sm:$0xf]
    %v155 = vld [vmem:[#allocation6 + $0x11c] sm:$0xf]
    %v156 = vld [vmem:[#allocation6 + $0x120] sm:$0xf]
    %v157 = vld [vmem:[#allocation6 + $0x124] sm:$0xf]
    %v158 = vld [vmem:[#allocation6 + $0x128] sm:$0xf]
    %v159 = vld [vmem:[#allocation6 + $0x12c] sm:$0xf]
    %v160 = vld [vmem:[#allocation6 + $0x130] sm:$0xf]
    %v161 = vld [vmem:[#allocation6 + $0x134] sm:$0xf]
    %v162 = vld [vmem:[#allocation6 + $0x138] sm:$0xf]
    %v163 = vld [vmem:[#allocation6 + $0x13c] sm:$0xf]
    %v164 = vld [vmem:[#allocation6 + $0x140] sm:$0xf]
    %v165 = vld [vmem:[#allocation6 + $0x144] sm:$0xf]
    %v166 = vld [vmem:[#allocation6 + $0x148] sm:$0xf]
    %v167 = vld [vmem:[#allocation6 + $0x14c] sm:$0xf]
    %v168 = vld [vmem:[#allocation6 + $0x150] sm:$0xf]
    %v169 = vld [vmem:[#allocation6 + $0x154] sm:$0xf]
    %v170 = vld [vmem:[#allocation6 + $0x158] sm:$0xf]
    %v171 = vld [vmem:[#allocation6 + $0x15c] sm:$0xf]
    %v172 = vld [vmem:[#allocation6 + $0x160] sm:$0xf]
    %v173 = vld [vmem:[#allocation6 + $0x164] sm:$0xf]
    %v174 = vld [vmem:[#allocation6 + $0x168] sm:$0xf]
    %v175 = vld [vmem:[#allocation6 + $0x16c] sm:$0xf]
    %v176 = vld [vmem:[#allocation6 + $0x170] sm:$0xf]
    %v177 = vld [vmem:[#allocation6 + $0x174] sm:$0xf]
    %v178 = vld [vmem:[#allocation6 + $0x178] sm:$0xf]
    %v179 = vld [vmem:[#allocation6 + $0x17c] sm:$0xf]
    %v180 = vld [vmem:[#allocation6 + $0x180] sm:$0xf]
    %v181 = vld [vmem:[#allocation6 + $0x184] sm:$0xf]
    %v182 = vld [vmem:[#allocation6 + $0x188] sm:$0xf]
    %v183 = vld [vmem:[#allocation6 + $0x18c] sm:$0xf]
    %v184 = vld [vmem:[#allocation6 + $0x190] sm:$0xf]
    %v185 = vld [vmem:[#allocation6 + $0x194] sm:$0xf]
    %v186 = vld [vmem:[#allocation6 + $0x198] sm:$0xf]
    %v187 = vld [vmem:[#allocation6 + $0x19c] sm:$0xf]
    %v188 = vld [vmem:[#allocation6 + $0x1a0] sm:$0xf]
    %v189 = vld [vmem:[#allocation6 + $0x1a4] sm:$0xf]
    %v190 = vld [vmem:[#allocation6 + $0x1a8] sm:$0xf]
    %v191 = vld [vmem:[#allocation6 + $0x1ac] sm:$0xf]
    %v192 = vld [vmem:[#allocation6 + $0x1b0] sm:$0xf]
    %v193 = vld [vmem:[#allocation6 + $0x1b4] sm:$0xf]
    %v194 = vld [vmem:[#allocation6 + $0x1b8] sm:$0xf]
    %v195 = vld [vmem:[#allocation6 + $0x1bc] sm:$0xf]
    %v196 = vld [vmem:[#allocation6 + $0x1c0] sm:$0xf]
    %v197 = vld [vmem:[#allocation6 + $0x1c4] sm:$0xf]
    %v198 = vld [vmem:[#allocation6 + $0x1c8] sm:$0xf]
    %v199 = vld [vmem:[#allocation6 + $0x1cc] sm:$0xf]
    %v200 = vld [vmem:[#allocation6 + $0x1d0] sm:$0xf]
    %v201 = vld [vmem:[#allocation6 + $0x1d4] sm:$0xf]
    %v202 = vld [vmem:[#allocation6 + $0x1d8] sm:$0xf]
    %v203 = vld [vmem:[#allocation6 + $0x1dc] sm:$0xf]
    %v204 = vld [vmem:[#allocation6 + $0x1e0] sm:$0xf]
    %v205 = vld [vmem:[#allocation6 + $0x1e4] sm:$0xf]
    %v206 = vld [vmem:[#allocation6 + $0x1e8] sm:$0xf]
    %v207 = vld [vmem:[#allocation6 + $0x1ec] sm:$0xf]
    %v208 = vld [vmem:[#allocation6 + $0x1f0] sm:$0xf]
    %v209 = vld [vmem:[#allocation6 + $0x1f4] sm:$0xf]
    %v210 = vld [vmem:[#allocation6 + $0x1f8] sm:$0xf]
    %v211 = vld [vmem:[#allocation6 + $0x1fc] sm:$0xf]
    %v220 = vunpack.c.l.b16 %v76
    %v221 = vunpack.c.h.b16 %v76
    %v222 = vunpack.c.l.b16 %v77
    %v223 = vunpack.c.h.b16 %v77
    %v224 = vunpack.c.l.b16 %v78
    %v225 = vunpack.c.h.b16 %v78
    %v226 = vunpack.c.l.b16 %v79
    %v227 = vunpack.c.h.b16 %v79
    %v228 = vunpack.c.l.b16 %v80
    %v229 = vunpack.c.h.b16 %v80
    %v230 = vunpack.c.l.b16 %v81
    %v231 = vunpack.c.h.b16 %v81
    %v232 = vunpack.c.l.b16 %v82
    %v233 = vunpack.c.h.b16 %v82
    %v234 = vunpack.c.l.b16 %v83
    %v235 = vunpack.c.h.b16 %v83
    %v236 = vpack.c.b16 %v228, %v220
    %v237 = vpack.c.b16 %v229, %v221
    %v238 = vpack.c.b16 %v230, %v222
    %v239 = vpack.c.b16 %v231, %v223
    %v240 = vpack.c.b16 %v232, %v224
    %v241 = vpack.c.b16 %v233, %v225
    %v242 = vpack.c.b16 %v234, %v226
    %v243 = vpack.c.b16 %v235, %v227
    %v380 = vunpack.c.l.b16 %v84
    %v381 = vunpack.c.l.b16 %v85
    %v382 = vunpack.c.l.b16 %v86
    %v383 = vunpack.c.l.b16 %v87
    %v384 = vunpack.c.l.b16 %v88
    %v385 = vunpack.c.l.b16 %v89
    %v386 = vunpack.c.l.b16 %v90
    %v387 = vunpack.c.l.b16 %v91
    %v388 = vunpack.c.l.b16 %v92
    %v389 = vunpack.c.l.b16 %v93
    %v390 = vunpack.c.l.b16 %v94
    %v391 = vunpack.c.l.b16 %v95
    %v392 = vunpack.c.l.b16 %v96
    %v393 = vunpack.c.l.b16 %v97
    %v394 = vunpack.c.l.b16 %v98
    %v395 = vunpack.c.l.b16 %v99
    %v396 = vunpack.c.l.b16 %v100
    %v397 = vunpack.c.l.b16 %v101
    %v398 = vunpack.c.l.b16 %v102
    %v399 = vunpack.c.l.b16 %v103
    %v400 = vunpack.c.l.b16 %v104
    %v401 = vunpack.c.l.b16 %v105
    %v402 = vunpack.c.l.b16 %v106
    %v403 = vunpack.c.l.b16 %v107
    %v404 = vunpack.c.l.b16 %v108
    %v405 = vunpack.c.l.b16 %v109
    %v406 = vunpack.c.l.b16 %v110
    %v407 = vunpack.c.l.b16 %v111
    %v408 = vunpack.c.l.b16 %v112
    %v409 = vunpack.c.l.b16 %v113
    %v410 = vunpack.c.l.b16 %v114
    %v411 = vunpack.c.l.b16 %v115
    %v412 = vunpack.c.l.b16 %v116
    %v413 = vunpack.c.l.b16 %v117
    %v414 = vunpack.c.l.b16 %v118
    %v415 = vunpack.c.l.b16 %v119
    %v416 = vunpack.c.l.b16 %v120
    %v417 = vunpack.c.l.b16 %v121
    %v418 = vunpack.c.l.b16 %v122
    %v419 = vunpack.c.l.b16 %v123
    %v420 = vunpack.c.l.b16 %v124
    %v421 = vunpack.c.l.b16 %v125
    %v422 = vunpack.c.l.b16 %v126
    %v423 = vunpack.c.l.b16 %v127
    %v424 = vunpack.c.l.b16 %v128
    %v425 = vunpack.c.l.b16 %v129
    %v426 = vunpack.c.l.b16 %v130
    %v427 = vunpack.c.l.b16 %v131
    %v428 = vunpack.c.l.b16 %v132
    %v429 = vunpack.c.l.b16 %v133
    %v430 = vunpack.c.l.b16 %v134
    %v431 = vunpack.c.l.b16 %v135
    %v432 = vunpack.c.l.b16 %v136
    %v433 = vunpack.c.l.b16 %v137
    %v434 = vunpack.c.l.b16 %v138
    %v435 = vunpack.c.l.b16 %v139
    %v436 = vunpack.c.l.b16 %v140
    %v437 = vunpack.c.l.b16 %v141
    %v438 = vunpack.c.l.b16 %v142
    %v439 = vunpack.c.l.b16 %v143
    %v440 = vunpack.c.l.b16 %v144
    %v441 = vunpack.c.l.b16 %v145
    %v442 = vunpack.c.l.b16 %v146
    %v443 = vunpack.c.l.b16 %v147
    %v444 = vunpack.c.l.b16 %v148
    %v445 = vunpack.c.l.b16 %v149
    %v446 = vunpack.c.l.b16 %v150
    %v447 = vunpack.c.l.b16 %v151
    %v448 = vunpack.c.l.b16 %v152
    %v449 = vunpack.c.l.b16 %v153
    %v450 = vunpack.c.l.b16 %v154
    %v451 = vunpack.c.l.b16 %v155
    %v452 = vunpack.c.l.b16 %v156
    %v453 = vunpack.c.l.b16 %v157
    %v454 = vunpack.c.l.b16 %v158
    %v455 = vunpack.c.l.b16 %v159
    %v456 = vunpack.c.l.b16 %v160
    %v457 = vunpack.c.l.b16 %v161
    %v458 = vunpack.c.l.b16 %v162
    %v459 = vunpack.c.l.b16 %v163
    %v460 = vunpack.c.l.b16 %v164
    %v461 = vunpack.c.l.b16 %v165
    %v462 = vunpack.c.l.b16 %v166
    %v463 = vunpack.c.l.b16 %v167
    %v464 = vunpack.c.l.b16 %v168
    %v465 = vunpack.c.l.b16 %v169
    %v466 = vunpack.c.l.b16 %v170
    %v467 = vunpack.c.l.b16 %v171
    %v468 = vunpack.c.l.b16 %v172
    %v469 = vunpack.c.l.b16 %v173
    %v470 = vunpack.c.l.b16 %v174
    %v471 = vunpack.c.l.b16 %v175
    %v472 = vunpack.c.l.b16 %v176
    %v473 = vunpack.c.l.b16 %v177
    %v474 = vunpack.c.l.b16 %v178
    %v475 = vunpack.c.l.b16 %v179
    %v476 = vunpack.c.l.b16 %v180
    %v477 = vunpack.c.l.b16 %v181
    %v478 = vunpack.c.l.b16 %v182
    %v479 = vunpack.c.l.b16 %v183
    %v480 = vunpack.c.l.b16 %v184
    %v481 = vunpack.c.l.b16 %v185
    %v482 = vunpack.c.l.b16 %v186
    %v483 = vunpack.c.l.b16 %v187
    %v484 = vunpack.c.l.b16 %v188
    %v485 = vunpack.c.l.b16 %v189
    %v486 = vunpack.c.l.b16 %v190
    %v487 = vunpack.c.l.b16 %v191
    %v488 = vunpack.c.l.b16 %v192
    %v489 = vunpack.c.l.b16 %v193
    %v490 = vunpack.c.l.b16 %v194
    %v491 = vunpack.c.l.b16 %v195
    %v492 = vunpack.c.l.b16 %v196
    %v493 = vunpack.c.l.b16 %v197
    %v494 = vunpack.c.l.b16 %v198
    %v495 = vunpack.c.l.b16 %v199
    %v496 = vunpack.c.l.b16 %v200
    %v497 = vunpack.c.l.b16 %v201
    %v498 = vunpack.c.l.b16 %v202
    %v499 = vunpack.c.l.b16 %v203
    %v500 = vunpack.c.l.b16 %v204
    %v501 = vunpack.c.l.b16 %v205
    %v502 = vunpack.c.l.b16 %v206
    %v503 = vunpack.c.l.b16 %v207
    %v504 = vunpack.c.l.b16 %v208
    %v505 = vunpack.c.l.b16 %v209
    %v506 = vunpack.c.l.b16 %v210
    %v507 = vunpack.c.l.b16 %v211
    %v508 = vpack.c.b16 %v381, %v380
    %v509 = vpack.c.b16 %v383, %v382
    %v510 = vpack.c.b16 %v385, %v384
    %v511 = vpack.c.b16 %v387, %v386
    %v512 = vpack.c.b16 %v389, %v388
    %v513 = vpack.c.b16 %v391, %v390
    %v514 = vpack.c.b16 %v393, %v392
    %v515 = vpack.c.b16 %v395, %v394
    %v516 = vpack.c.b16 %v397, %v396
    %v517 = vpack.c.b16 %v399, %v398
    %v518 = vpack.c.b16 %v401, %v400
    %v519 = vpack.c.b16 %v403, %v402
    %v520 = vpack.c.b16 %v405, %v404
    %v521 = vpack.c.b16 %v407, %v406
    %v522 = vpack.c.b16 %v409, %v408
    %v523 = vpack.c.b16 %v411, %v410
    %v524 = vpack.c.b16 %v413, %v412
    %v525 = vpack.c.b16 %v415, %v414
    %v526 = vpack.c.b16 %v417, %v416
    %v527 = vpack.c.b16 %v419, %v418
    %v528 = vpack.c.b16 %v421, %v420
    %v529 = vpack.c.b16 %v423, %v422
    %v530 = vpack.c.b16 %v425, %v424
    %v531 = vpack.c.b16 %v427, %v426
    %v532 = vpack.c.b16 %v429, %v428
    %v533 = vpack.c.b16 %v431, %v430
    %v534 = vpack.c.b16 %v433, %v432
    %v535 = vpack.c.b16 %v435, %v434
    %v536 = vpack.c.b16 %v437, %v436
    %v537 = vpack.c.b16 %v439, %v438
    %v538 = vpack.c.b16 %v441, %v440
    %v539 = vpack.c.b16 %v443, %v442
    %v540 = vpack.c.b16 %v445, %v444
    %v541 = vpack.c.b16 %v447, %v446
    %v542 = vpack.c.b16 %v449, %v448
    %v543 = vpack.c.b16 %v451, %v450
    %v544 = vpack.c.b16 %v453, %v452
    %v545 = vpack.c.b16 %v455, %v454
    %v546 = vpack.c.b16 %v457, %v456
    %v547 = vpack.c.b16 %v459, %v458
    %v548 = vpack.c.b16 %v461, %v460
    %v549 = vpack.c.b16 %v463, %v462
    %v550 = vpack.c.b16 %v465, %v464
    %v551 = vpack.c.b16 %v467, %v466
    %v552 = vpack.c.b16 %v469, %v468
    %v553 = vpack.c.b16 %v471, %v470
    %v554 = vpack.c.b16 %v473, %v472
    %v555 = vpack.c.b16 %v475, %v474
    %v556 = vpack.c.b16 %v477, %v476
    %v557 = vpack.c.b16 %v479, %v478
    %v558 = vpack.c.b16 %v481, %v480
    %v559 = vpack.c.b16 %v483, %v482
    %v560 = vpack.c.b16 %v485, %v484
    %v561 = vpack.c.b16 %v487, %v486
    %v562 = vpack.c.b16 %v489, %v488
    %v563 = vpack.c.b16 %v491, %v490
    %v564 = vpack.c.b16 %v493, %v492
    %v565 = vpack.c.b16 %v495, %v494
    %v566 = vpack.c.b16 %v497, %v496
    %v567 = vpack.c.b16 %v499, %v498
    %v568 = vpack.c.b16 %v501, %v500
    %v569 = vpack.c.b16 %v503, %v502
    %v570 = vpack.c.b16 %v505, %v504
    %v571 = vpack.c.b16 %v507, %v506
    %636 = vmatpush.bf16.msra.mxu0 %v515
    %637 = vmatpush.bf16.msra.mxu0 %v514
    %638 = vmatpush.bf16.msra.mxu0 %v513
    %639 = vmatpush.bf16.msra.mxu0 %v512
    %640 = vmatpush.bf16.msra.mxu0 %v511
    %641 = vmatpush.bf16.msra.mxu0 %v510
    %642 = vmatpush.bf16.msra.mxu0 %v509
    %643 = vmatpush.bf16.msra.mxu0 %v508
    %644 = vmatmul.bf16.gmra.mxu0 %v236
    %v645 = vpop.f32.mrf.mxu0
    %v646 = vadd.f32 0.0, %v645
    %v647 = vpop.f32.mrf.mxu0
    %v648 = vadd.f32 0.0, %v647
    %649 = vdwg.mxu0
    %650 = vmatpush.bf16.msra.mxu0 %v523
    %651 = vmatpush.bf16.msra.mxu0 %v522
    %652 = vmatpush.bf16.msra.mxu0 %v521
    %653 = vmatpush.bf16.msra.mxu0 %v520
    %654 = vmatpush.bf16.msra.mxu0 %v519
    %655 = vmatpush.bf16.msra.mxu0 %v518
    %656 = vmatpush.bf16.msra.mxu0 %v517
    %657 = vmatpush.bf16.msra.mxu0 %v516
    %658 = vmatmul.bf16.gmra.mxu0 %v237
    %v659 = vpop.f32.mrf.mxu0
    %v660 = vadd.f32 %v646, %v659
    %v661 = vpop.f32.mrf.mxu0
    %v662 = vadd.f32 %v648, %v661
    %663 = vdwg.mxu0
    %664 = vmatpush.bf16.msra.mxu0 %v531
    %665 = vmatpush.bf16.msra.mxu0 %v530
    %666 = vmatpush.bf16.msra.mxu0 %v529
    %667 = vmatpush.bf16.msra.mxu0 %v528
    %668 = vmatpush.bf16.msra.mxu0 %v527
    %669 = vmatpush.bf16.msra.mxu0 %v526
    %670 = vmatpush.bf16.msra.mxu0 %v525
    %671 = vmatpush.bf16.msra.mxu0 %v524
    %672 = vmatmul.bf16.gmra.mxu0 %v238
    %v673 = vpop.f32.mrf.mxu0
    %v674 = vadd.f32 %v660, %v673
    %v675 = vpop.f32.mrf.mxu0
    %v676 = vadd.f32 %v662, %v675
    %677 = vdwg.mxu0
    %678 = vmatpush.bf16.msra.mxu0 %v539
    %679 = vmatpush.bf16.msra.mxu0 %v538
    %680 = vmatpush.bf16.msra.mxu0 %v537
    %681 = vmatpush.bf16.msra.mxu0 %v536
    %682 = vmatpush.bf16.msra.mxu0 %v535
    %683 = vmatpush.bf16.msra.mxu0 %v534
    %684 = vmatpush.bf16.msra.mxu0 %v533
    %685 = vmatpush.bf16.msra.mxu0 %v532
    %686 = vmatmul.bf16.gmra.mxu0 %v239
    %v687 = vpop.f32.mrf.mxu0
    %v688 = vadd.f32 %v674, %v687
    %v689 = vpop.f32.mrf.mxu0
    %v690 = vadd.f32 %v676, %v689
    %691 = vdwg.mxu0
    %692 = vmatpush.bf16.msra.mxu0 %v547
    %693 = vmatpush.bf16.msra.mxu0 %v546
    %694 = vmatpush.bf16.msra.mxu0 %v545
    %695 = vmatpush.bf16.msra.mxu0 %v544
    %696 = vmatpush.bf16.msra.mxu0 %v543
    %697 = vmatpush.bf16.msra.mxu0 %v542
    %698 = vmatpush.bf16.msra.mxu0 %v541
    %699 = vmatpush.bf16.msra.mxu0 %v540
    %700 = vmatmul.bf16.gmra.mxu0 %v240
    %v701 = vpop.f32.mrf.mxu0
    %v702 = vadd.f32 %v688, %v701
    %v703 = vpop.f32.mrf.mxu0
    %v704 = vadd.f32 %v690, %v703
    %705 = vdwg.mxu0
    %706 = vmatpush.bf16.msra.mxu0 %v555
    %707 = vmatpush.bf16.msra.mxu0 %v554
    %708 = vmatpush.bf16.msra.mxu0 %v553
    %709 = vmatpush.bf16.msra.mxu0 %v552
    %710 = vmatpush.bf16.msra.mxu0 %v551
    %711 = vmatpush.bf16.msra.mxu0 %v550
    %712 = vmatpush.bf16.msra.mxu0 %v549
    %713 = vmatpush.bf16.msra.mxu0 %v548
    %714 = vmatmul.bf16.gmra.mxu0 %v241
    %v715 = vpop.f32.mrf.mxu0
    %v716 = vadd.f32 %v702, %v715
    %v717 = vpop.f32.mrf.mxu0
    %v718 = vadd.f32 %v704, %v717
    %719 = vdwg.mxu0
    %720 = vmatpush.bf16.msra.mxu0 %v563
    %721 = vmatpush.bf16.msra.mxu0 %v562
    %722 = vmatpush.bf16.msra.mxu0 %v561
    %723 = vmatpush.bf16.msra.mxu0 %v560
    %724 = vmatpush.bf16.msra.mxu0 %v559
    %725 = vmatpush.bf16.msra.mxu0 %v558
    %726 = vmatpush.bf16.msra.mxu0 %v557
    %727 = vmatpush.bf16.msra.mxu0 %v556
    %728 = vmatmul.bf16.gmra.mxu0 %v242
    %v729 = vpop.f32.mrf.mxu0
    %v730 = vadd.f32 %v716, %v729
    %v731 = vpop.f32.mrf.mxu0
    %v732 = vadd.f32 %v718, %v731
    %733 = vdwg.mxu0
    %734 = vmatpush.bf16.msra.mxu0 %v571
    %735 = vmatpush.bf16.msra.mxu0 %v570
    %736 = vmatpush.bf16.msra.mxu0 %v569
    %737 = vmatpush.bf16.msra.mxu0 %v568
    %738 = vmatpush.bf16.msra.mxu0 %v567
    %739 = vmatpush.bf16.msra.mxu0 %v566
    %740 = vmatpush.bf16.msra.mxu0 %v565
    %741 = vmatpush.bf16.msra.mxu0 %v564
    %742 = vmatmul.bf16.gmra.mxu0 %v243
    %v743 = vpop.f32.mrf.mxu0
    %v744 = vadd.f32 %v730, %v743
    %v745 = vpop.f32.mrf.mxu0
    %v746 = vadd.f32 %v732, %v745
    %747 = vdwg.mxu0
    %v748 = vadd.f32 %v74, %v744
    %v749 = vadd.f32 %v75, %v746
    %750 = vst [vmem:[#allocation2] sm:$0xff] %v748
    %751 = vst [vmem:[#allocation2 + $0x8] sm:$0xff] %v749
    // Predicated region
    $region38: #{tpu_custom_call.1} parent=1 // pred_check
      %p752 = pneg %p68
    $region39: #{tpu_custom_call.1} parent=1 // pred_check_branch
      %754 = sbr.rel (%p752) target = $region41
    $region40: #{tpu_custom_call.1} parent=1 // pred_region
      %v755 = vld [vmem:[#allocation2] sm:$0xff]
      %v756 = vld [vmem:[#allocation2 + $0x8] sm:$0xff]
      %v757 = vld [vmem:[%s2] sm:$0x1]
      %v759 = vperm.slane %v757, 0
      %v761 = vadd.f32 %v755, %v759
      %v762 = vadd.f32 %v756, %v759
      %v763 = vmax.f32 %v761, 0.0
      %v764 = vmax.f32 %v762, 0.0
      %v765 = vpack.c.bf16 %v764, %v763
      %v766 = vld [vmem:[#allocation8] sm:$0xf]
      %v767 = vld [vmem:[#allocation8 + $0x4] sm:$0xf]
      %v768 = vld [vmem:[#allocation8 + $0x8] sm:$0xf]
      %v769 = vld [vmem:[#allocation8 + $0xc] sm:$0xf]
      %v770 = vld [vmem:[#allocation8 + $0x10] sm:$0xf]
      %v771 = vld [vmem:[#allocation8 + $0x14] sm:$0xf]
      %v772 = vld [vmem:[#allocation8 + $0x18] sm:$0xf]
      %v773 = vld [vmem:[#allocation8 + $0x1c] sm:$0xf]
      %v774 = vld [vmem:[#allocation8 + $0x20] sm:$0xf]
      %v775 = vld [vmem:[#allocation8 + $0x24] sm:$0xf]
      %v776 = vld [vmem:[#allocation8 + $0x28] sm:$0xf]
      %v777 = vld [vmem:[#allocation8 + $0x2c] sm:$0xf]
      %v778 = vld [vmem:[#allocation8 + $0x30] sm:$0xf]
      %v779 = vld [vmem:[#allocation8 + $0x34] sm:$0xf]
      %v780 = vld [vmem:[#allocation8 + $0x38] sm:$0xf]
      %v781 = vld [vmem:[#allocation8 + $0x3c] sm:$0xf]
      %v782 = vld [vmem:[%s4] sm:$0x1]
      %v784 = vperm.slane %v782, 0
      %v802 = vunpack.c.l.b16 %v766
      %v803 = vunpack.c.l.b16 %v767
      %v804 = vunpack.c.l.b16 %v768
      %v805 = vunpack.c.l.b16 %v769
      %v806 = vunpack.c.l.b16 %v770
      %v807 = vunpack.c.l.b16 %v771
      %v808 = vunpack.c.l.b16 %v772
      %v809 = vunpack.c.l.b16 %v773
      %v810 = vunpack.c.l.b16 %v774
      %v811 = vunpack.c.l.b16 %v775
      %v812 = vunpack.c.l.b16 %v776
      %v813 = vunpack.c.l.b16 %v777
      %v814 = vunpack.c.l.b16 %v778
      %v815 = vunpack.c.l.b16 %v779
      %v816 = vunpack.c.l.b16 %v780
      %v817 = vunpack.c.l.b16 %v781
      %v818 = vpack.c.b16 %v803, %v802
      %v819 = vpack.c.b16 %v805, %v804
      %v820 = vpack.c.b16 %v807, %v806
      %v821 = vpack.c.b16 %v809, %v808
      %v822 = vpack.c.b16 %v811, %v810
      %v823 = vpack.c.b16 %v813, %v812
      %v824 = vpack.c.b16 %v815, %v814
      %v825 = vpack.c.b16 %v817, %v816
      %834 = vmatpush.bf16.msra.mxu0 %v825
      %835 = vmatpush.bf16.msra.mxu0 %v824
      %836 = vmatpush.bf16.msra.mxu0 %v823
      %837 = vmatpush.bf16.msra.mxu0 %v822
      %838 = vmatpush.bf16.msra.mxu0 %v821
      %839 = vmatpush.bf16.msra.mxu0 %v820
      %840 = vmatpush.bf16.msra.mxu0 %v819
      %841 = vmatpush.bf16.msra.mxu0 %v818
      %842 = vmatmul.bf16.gmra.mxu0 %v765
      %v843 = vpop.f32.mrf.mxu0
      %v844 = vadd.f32 %v784, %v843
      %v845 = vpop.f32.mrf.mxu0
      %v846 = vadd.f32 %v784, %v845
      %847 = vdwg.mxu0
      %848 = vst [vmem:[#allocation9] sm:$0xff] %v844
      %849 = vst [vmem:[#allocation9 + $0x8] sm:$0xff] %v846
    $region41: #{tpu_custom_call.1} parent=1 // pred_fallthru
      _
    // Predicated region
    $region42: #{tpu_custom_call.1} parent=1 // pred_check
      _
    $region43: #{tpu_custom_call.1} parent=1 // pred_check_branch
      %851 = sbr.rel (0) target = $region45
    $region44: #{tpu_custom_call.1} parent=1 // pred_region
      %853 = vsyncadd [#allocation5], 0
      %s854 = sshll.u32 [#allocation9], 4
      %s855 = int_to_ptr.vmem [resolvable:$true] %s854
      %s856 = sshll.u32 %s5, 4
      %s857 = int_to_ptr.hbm [resolvable:$true] %s856
      %862 = dma.vmem_to_hbm [thread:$0]  %s855, 256, %s857, [#allocation5], 128, 128, 8
    $region45: #{tpu_custom_call.1} parent=1 // pred_fallthru
      _
    // Predicated region
    $region46: #{tpu_custom_call.1} parent=1 // pred_check
      _
    $region47: #{tpu_custom_call.1} parent=1 // pred_check_branch
      %864 = sbr.rel (0) target = $region49
    $region48: #{tpu_custom_call.1} parent=1 // pred_region
      %866 = dma.done [#allocation5], 256
    $region49: #{tpu_custom_call.1} parent=1 // pred_fallthru
      _
    %867 = vsyncpa [#allocation4], 1
    %868 = vsyncpa [#allocation7], 1
    %869 = vsyncpa [#allocation5], 1

</llo_original>
